<compile_context>
chip_gen: v7x
topology: tpu7x:2x2x1
jax: 0.10.0
libtpu: 0.0.40
codegen_flags: <defaults>
</compile_context>

<pallas_src>
import functools
import math

import jax
import jax.numpy as jnp
from jax.experimental import pallas as pl
from jax.experimental.pallas import tpu as pltpu

_EPS = 1e-5  # InstanceNorm2d eps


def _round_up(v, m):
    return -(-v // m) * m


# ----------------------------------------------------------------------------
# Generation-aware VMEM budget (per perf review)
# ----------------------------------------------------------------------------
@functools.lru_cache(maxsize=None)
def _vmem_budget():
    """(per-step tile budget, vmem_limit_bytes) per TPU generation."""
    try:
        kind = jax.devices()[0].device_kind.lower()
    except Exception:  # pragma: no cover
        kind = ""
    if "v7" in kind:                                   # 64 MiB physical VMEM
        return 24 * 1024 * 1024, 48 * 1024 * 1024
    if "v6" in kind:                                   # 128 MiB physical VMEM
        return 48 * 1024 * 1024, 96 * 1024 * 1024
    if "v5 lite" in kind or "v5e" in kind:             # keep modest on v5e
        return 12 * 1024 * 1024, 32 * 1024 * 1024
    return 12 * 1024 * 1024, 32 * 1024 * 1024          # conservative default


# ----------------------------------------------------------------------------
# Pallas kernels
# ----------------------------------------------------------------------------
def _bmm_kernel(w_ref, x_ref, b_ref, o_ref, *, fused):
    # w_ref: (1, OC, K) bf16   x_ref: (nbt, K, tn) bf16
    # b_ref: (1, OC, 1) f32    o_ref: (nbt, OC, tn) f32
    w = w_ref[0]
    bias = b_ref[0]
    for i in range(x_ref.shape[0]):          # nbt <= 8 (bounded unroll)
        y = jnp.dot(w, x_ref[i], preferred_element_type=jnp.float32) + bias
        if fused:
            # InstanceNorm2d(affine=False): per-(batch, channel) stats over the
            # full spatial axis (valid because tn == S, see wrapper).
            mean = jnp.mean(y, axis=-1, keepdims=True)
            ex2 = jnp.mean(y * y, axis=-1, keepdims=True)
            var = jnp.maximum(ex2 - mean * mean, 0.0)
            y = (y - mean) * jax.lax.rsqrt(var + _EPS)
            # LeakyReLU(negative_slope=1.0) is the identity -> omitted.
        o_ref[i] = y


def _instnorm_kernel(x_ref, o_ref):
    x = x_ref[...]
    mean = jnp.mean(x, axis=-1, keepdims=True)
    ex2 = jnp.mean(x * x, axis=-1, keepdims=True)
    var = jnp.maximum(ex2 - mean * mean, 0.0)
    # LeakyReLU(negative_slope=1.0) is the identity -> omitted.
    o_ref[...] = (x - mean) * jax.lax.rsqrt(var + _EPS)


# ----------------------------------------------------------------------------
# Pallas wrappers
# ----------------------------------------------------------------------------
_SPATIAL_TILES = (16384, 8192, 4096, 2048, 1024, 512, 256, 128)


def _pick_tiles(NB, OC, K, S, n_groups):
    """Choose (spatial tile, padded S, batch tile) under a generation-aware
    VMEM budget.  nbt always divides NB (no batch padding) and, when NB > 1,
    is capped at NB//2 so the grid keeps >= 2 steps (v7x has 2 TensorCores)."""
    budget, _ = _vmem_budget()
    Kp = _round_up(K, 16)      # bf16 second-minor tiling
    OCp = _round_up(OC, 8)     # f32 second-minor tiling
    w_bytes = 2 * (_round_up(OC, 16) * _round_up(K, 128) * 2 + OCp * 128 * 4)

    def step_bytes(nbt, t):
        t128 = _round_up(t, 128)
        return w_bytes + 2 * nbt * (Kp * t128 * 2 + OCp * t128 * 4)

    # Spatial tile: prefer the whole spatial axis (enables fused InstanceNorm).
    if step_bytes(1, S) <= budget:
        tn, Sp = S, S
    else:
        cands = [t for t in _SPATIAL_TILES if step_bytes(1, t) <= budget]
        if not cands:
            cands = [128]
        divs = [t for t in cands if S % t == 0]
        tn = divs[0] if divs else cands[0]      # largest fitting (prefer divisor)
        Sp = _round_up(S, tn)

    nbt = 1
    if n_groups == 1 and NB > 1:
        cap = min(8, max(1, NB // 2))
        for d in range(cap, 0, -1):
            if NB % d == 0 and step_bytes(d, tn) <= budget:
                nbt = d
                break
    return tn, Sp, nbt


def _instance_norm_rows(xr):
    """InstanceNorm over the last axis of a (rows, S) f32 array (rows tiled).
    Only used as the fallback when the spatial axis had to be tiled."""
    R, S = xr.shape
    budget, vmem_limit = _vmem_budget()
    per_row = 2 * 2 * _round_up(S, 128) * 4          # in + out, double buffered
    max_rows = max(8, (budget // per_row) // 8 * 8)
    if R <= max_rows:
        tr, Rp = R, R
    else:
        tr = max_rows
        Rp = _round_up(R, tr)
    x_in = jnp.pad(xr, ((0, Rp - R), (0, 0))) if Rp != R else xr
    out = pl.pallas_call(
        _instnorm_kernel,
        out_shape=jax.ShapeDtypeStruct((Rp, S), jnp.float32),
        grid=(Rp // tr,),
        in_specs=[pl.BlockSpec((tr, S), lambda i: (i, 0))],
        out_specs=pl.BlockSpec((tr, S), lambda i: (i, 0)),
        compiler_params=pltpu.CompilerParams(
            dimension_semantics=("parallel",),
            vmem_limit_bytes=vmem_limit),
    )(x_in)
    return out[:R] if Rp != R else out


@functools.partial(jax.jit, static_argnames=("n_groups", "fuse_norm"))
def batched_matmul_bias(w, x, b, *, n_groups=1, fuse_norm=False):
    """out[nb] = w[nb % n_groups] @ x[nb] + b[nb % n_groups][:, None]
    (optionally fused with per-(nb, row) instance norm over the last axis).

    w: (G, OC, K), x: (NB, K, S) (any float dtype; used as bf16 on the MXU),
    b: (G, OC)  ->  (NB, OC, S) f32.
    """
    G, OC, K = w.shape
    NB, _, S = x.shape
    tn, Sp, nbt = _pick_tiles(NB, OC, K, S, n_groups)
    fused = fuse_norm and tn == S
    _, vmem_limit = _vmem_budget()

    if Sp != S:
        x = jnp.pad(x, ((0, 0), (0, 0), (0, Sp - S)))
    wb = w.astype(jnp.bfloat16)
    xb = x.astype(jnp.bfloat16)   # no-op: callers already hand bf16 patches
    bb = b.reshape(G, OC, 1).astype(jnp.float32)

    if n_groups == 1:
        w_map = lambda nb, s: (0, 0, 0)
    else:
        w_map = lambda nb, s: (nb % n_groups, 0, 0)

    out = pl.pallas_call(
        functools.partial(_bmm_kernel, fused=fused),
        out_shape=jax.ShapeDtypeStruct((NB, OC, Sp), jnp.float32),
        grid=(NB // nbt, Sp // tn),
        in_specs=[
            pl.BlockSpec((1, OC, K), w_map),
            pl.BlockSpec((nbt, K, tn), lambda nb, s: (nb, 0, s)),
            pl.BlockSpec((1, OC, 1), w_map),
        ],
        out_specs=pl.BlockSpec((nbt, OC, tn), lambda nb, s: (nb, 0, s)),
        compiler_params=pltpu.CompilerParams(
            dimension_semantics=("parallel", "parallel"),
            vmem_limit_bytes=vmem_limit),
    )(wb, xb, bb)

    if Sp != S:
        out = out[:, :, :S]
    if fuse_norm and not fused:
        # Spatial axis had to be tiled -> normalize in a separate pass.
        out = _instance_norm_rows(out.reshape(NB * OC, S)).reshape(NB, OC, S)
    return out


# ----------------------------------------------------------------------------
# Convolutions (patch extraction in XLA glue, matmul + norm in Pallas)
# ----------------------------------------------------------------------------
def _extract_patches(xp, kh, kw, stride, oh, ow):
    # xp: (N, C, Hp, Wp) -> (N, C*kh*kw, oh*ow), K ordered (c, i, j).
    n, c = xp.shape[0], xp.shape[1]
    taps = []
    for i in range(kh):
        for j in range(kw):
            taps.append(
                xp[:, :,
                   i:i + stride * (oh - 1) + 1:stride,
                   j:j + stride * (ow - 1) + 1:stride])
    p = jnp.stack(taps, axis=2)  # (N, C, kh*kw, oh, ow)
    return p.reshape(n, c * kh * kw, oh * ow)


@functools.partial(jax.jit, static_argnames=("stride", "padding", "norm"))
def conv2d(x, w, b, *, stride=1, padding=0, norm=False):
    """PyTorch-compatible Conv2d; x NCHW, w (OC, IC, KH, KW). `norm=True`
    fuses InstanceNorm2d + LeakyReLU(True) (identity) into the same kernel."""
    n, cin, h, ww = x.shape
    oc, _, kh, kw = w.shape
    oh = (h + 2 * padding - kh) // stride + 1
    ow = (ww + 2 * padding - kw) // stride + 1
    # Cast the small (un-inflated) input once; patches are built + streamed in
    # bf16 (the MXU operands are bf16 anyway), halving patch HBM traffic.
    # TODO(synk): building the im2col taps in-kernel (shifted pl.ds slices on
    # the padded NCHW input) would also remove the kh*kw patch inflation.
    xb = x.astype(jnp.bfloat16)
    if kh == 1 and kw == 1 and stride == 1 and padding == 0:
        patches = xb.reshape(n, cin, h * ww)
    else:
        xp = jnp.pad(xb, ((0, 0), (0, 0), (padding, padding), (padding, padding)))
        patches = _extract_patches(xp, kh, kw, stride, oh, ow)
    wm = w.reshape(1, oc, cin * kh * kw)
    y = batched_matmul_bias(wm, patches, b.reshape(1, oc), fuse_norm=norm)
    return y.reshape(n, oc, oh, ow)


@functools.partial(jax.jit, static_argnames=("norm",))
def conv_transpose2d(x, w, b, *, norm=False):
    """PyTorch ConvTranspose2d with kernel=4, stride=2, padding=1 (the only
    configuration used), via sub-pixel decomposition into 4 phase 2x2 convs.
    w: (IC, OC, 4, 4).  `norm=True` applies InstanceNorm2d (+LeakyReLU(True)
    == identity) with stats computed on the phase-form tensor (mathematically
    identical; avoids an extra pass over the 4x-upsampled activation)."""
    n, cin, h, ww = x.shape
    _, oc, _, _ = w.shape
    xb = x.astype(jnp.bfloat16)
    xp = jnp.pad(xb, ((0, 0), (0, 0), (1, 1), (1, 1)))
    pat_phases, w_phases = [], []
    for p_ in range(2):
        for q_ in range(2):
            taps = []
            for dy in range(2):
                for dx in range(2):
                    taps.append(xp[:, :, p_ + dy:p_ + dy + h, q_ + dx:q_ + dx + ww])
            pat = jnp.stack(taps, axis=2).reshape(n, cin * 4, h * ww)
            pat_phases.append(pat)
            # out[2m+p, 2n+q] += x[m-1+p+dy, n-1+q+dx] * w[:, :, 3-p-2dy, 3-q-2dx]
            wsub = w[:, :, (3 - p_, 1 - p_), :][:, :, :, (3 - q_, 1 - q_)]
            w_phases.append(jnp.transpose(wsub, (1, 0, 2, 3)).reshape(oc, cin * 4))
    xall = jnp.stack(pat_phases, axis=1).reshape(n * 4, cin * 4, h * ww)
    wall = jnp.stack(w_phases, axis=0)                          # (4, OC, IC*4)
    ball = jnp.broadcast_to(b.reshape(1, oc), (4, oc))
    y = batched_matmul_bias(wall, xall, ball, n_groups=4)       # (n*4, OC, h*ww)
    if norm:
        yp = y.reshape(n, 4, oc, h * ww)
        mean = jnp.mean(yp, axis=(1, 3), keepdims=True)
        ex2 = jnp.mean(yp * yp, axis=(1, 3), keepdims=True)
        var = jnp.maximum(ex2 - mean * mean, 0.0)
        y = ((yp - mean) * jax.lax.rsqrt(var + _EPS)).reshape(n * 4, oc, h * ww)
        # LeakyReLU(negative_slope=1.0) is the identity -> omitted.
    y = y.reshape(n, 2, 2, oc, h, ww)
    y = jnp.transpose(y, (0, 3, 4, 1, 5, 2)).reshape(n, oc, 2 * h, 2 * ww)
    return y


def conv_in(p, x, stride, padding):
    return conv2d(x, p["w"], p["b"], stride=stride, padding=padding, norm=True)


# ----------------------------------------------------------------------------
# space_to_depth / depth_to_space (glue)
# ----------------------------------------------------------------------------
def space_to_depth(x, b):
    n, c, h, w = x.shape
    x = x.reshape(n, c, h // b, b, w // b, b)
    x = x.transpose(0, 1, 3, 5, 2, 4)
    return x.reshape(n, c * b * b, h // b, w // b)


def depth_to_space(x, b):
    n, cb, h, w = x.shape
    c = cb // (b * b)
    x = x.reshape(n, c, b, b, h, w)
    x = x.transpose(0, 1, 4, 2, 5, 3)
    return x.reshape(n, c, h * b, w * b)


# ----------------------------------------------------------------------------
# Parameter initialization (deterministic, in-script)
# ----------------------------------------------------------------------------
class ParamGen:
    def __init__(self, key):
        self._key = key

    def _next(self):
        self._key, k = jax.random.split(self._key)
        return k

    def conv(self, oc, ic, k):
        fan_in = float(ic * k * k)
        w = jax.random.normal(self._next(), (oc, ic, k, k), jnp.float32) / math.sqrt(fan_in)
        b = 0.01 * jax.random.normal(self._next(), (oc,), jnp.float32)
        return dict(w=w, b=b)

    def convt(self, ic, oc, k):
        fan_in = float(ic * k * k)
        w = jax.random.normal(self._next(), (ic, oc, k, k), jnp.float32) / math.sqrt(fan_in)
        b = 0.01 * jax.random.normal(self._next(), (oc,), jnp.float32)
        return dict(w=w, b=b)


# ----------------------------------------------------------------------------
# pfrb_sig_block
# ----------------------------------------------------------------------------
def init_pfrb(pg, in_ch=1, ou_ch=1, num_fre=31, num_represent=4, num_base_represent=1):
    nr, nb = num_represent, num_base_represent
    return dict(
        cfg=(in_ch, ou_ch, num_fre, nr, nb),
        conv1=pg.conv(nr * in_ch, in_ch, 3),
        con_base=pg.conv(nr * in_ch * nb, num_fre * nr * in_ch, 1),
        conv2=pg.conv(in_ch * nr, nr * in_ch * (nb + 1), 3),
        conv3=pg.conv(ou_ch, in_ch * (nr + 1), 3),
    )


def pfrb_forward(p, x):
    # TODO(synk): generalization of the reference forward (which only
    # type-checks for in_ch==1 / num_base_represent==1) to the channel counts
    # declared in __init__; identical to the reference for in_ch==1, nb==1.
    in_ch, ou_ch, num_fre, nr, nb = p["cfg"]
    B, CH, H, W = x.shape
    assert CH == num_fre * in_ch, (CH, num_fre, in_ch)
    xg = x.reshape(B * num_fre, in_ch, H, W)
    inpu1 = conv_in(p["conv1"], xg, 1, 1)                       # (B*nf, nr*in, H, W)
    base = inpu1.reshape(B, num_fre * nr * in_ch, H, W)
    base = conv_in(p["con_base"], base, 1, 0)                   # (B, nr*in*nb, H, W)
    base = jnp.broadcast_to(base[:, None], (B, num_fre) + base.shape[1:])
    base = base.reshape(B * num_fre, nr * in_ch * nb, H, W)     # repeat_interleave
    base = jnp.concatenate([base, inpu1], axis=1)
    base = conv_in(p["conv2"], base, 1, 1)                      # (B*nf, in*nr, H, W)
    base = jnp.concatenate([base, xg], axis=1)
    base = conv_in(p["conv3"], base, 1, 1)                      # (B*nf, ou, H, W)
    return base.reshape(B, num_fre * ou_ch, H, W)


# ----------------------------------------------------------------------------
# C_CT
# ----------------------------------------------------------------------------
def init_cct(pg, num_fre=31, num_base_repre=2, num_represent=2, inter_ch=3):
    return dict(
        l1up_pfrb=init_pfrb(pg, 1, inter_ch, num_fre, num_represent, num_base_repre),
        l1up_ct=pg.convt(inter_ch * num_fre, inter_ch * num_fre, 4),
        l2up_pfrb=init_pfrb(pg, inter_ch * 2, inter_ch, num_fre, num_represent, num_base_repre),
        l2up_ct=pg.convt(inter_ch * num_fre, inter_ch * num_fre, 4),
        l3up_pfrb=init_pfrb(pg, inter_ch + 1, 1, num_fre, num_represent, num_base_repre),
        l2dn_pfrb=init_pfrb(pg, 1, inter_ch, num_fre, num_represent, num_base_repre),
        l2dn_c=pg.conv(inter_ch * num_fre, inter_ch * num_fre, 4),
        l1dn_pfrb=init_pfrb(pg, inter_ch, 1, num_fre, num_represent, num_base_repre),
        l1dn_c=pg.conv(num_fre, num_fre, 4),
    )


def cct_forward(p, Zk, lr_hsi):
    down1 = pfrb_forward(p["l2dn_pfrb"], Zk)
    down1 = conv_in(p["l2dn_c"], down1, 2, 1)
    e = pfrb_forward(p["l1dn_pfrb"], down1)
    e = conv_in(p["l1dn_c"], e, 2, 1)
    e = e - lr_hsi
    up1 = pfrb_forward(p["l1up_pfrb"], e)
    up1 = conv_transpose2d(up1, p["l1up_ct"]["w"], p["l1up_ct"]["b"], norm=True)
    up1 = jnp.concatenate([up1, down1], axis=1)
    up1 = pfrb_forward(p["l2up_pfrb"], up1)
    up1 = conv_transpose2d(up1, p["l2up_ct"]["w"], p["l2up_ct"]["b"], norm=True)
    up1 = jnp.concatenate([up1, Zk], axis=1)
    up1 = pfrb_forward(p["l3up_pfrb"], up1)
    return up1, e


# ----------------------------------------------------------------------------
# Prox
# ----------------------------------------------------------------------------
def init_prox(pg, in_ch, ou_ch):
    return dict(
        ly1=init_pfrb(pg, 1, 1),
        d1a=pg.conv(in_ch, in_ch, 4), d1b=pg.conv(in_ch * 2, in_ch, 3),
        d2a=pg.conv(in_ch * 2, in_ch * 2, 4), d2b=pg.conv(in_ch * 4, in_ch * 2, 3),
        u2a=pg.convt(in_ch * 4, in_ch * 2, 4), u2b=pg.conv(in_ch * 2, in_ch * 2, 3),
        u1a=pg.convt(in_ch * 4, in_ch * 2, 4), u1b=pg.conv(in_ch * 2, in_ch * 2, 3),
        oa=pg.conv(ou_ch, in_ch * 3, 3), ob=pg.conv(ou_ch, ou_ch, 3),
    )


def prox_forward(p, x):
    d1 = conv2d(x, p["d1a"]["w"], p["d1a"]["b"], stride=2, padding=1)
    d1 = conv_in(p["d1b"], d1, 1, 1)
    d2 = conv2d(d1, p["d2a"]["w"], p["d2a"]["b"], stride=2, padding=1)
    d2 = conv_in(p["d2b"], d2, 1, 1)
    d2 = conv_transpose2d(d2, p["u2a"]["w"], p["u2a"]["b"])
    d2 = conv_in(p["u2b"], d2, 1, 1)
    d2 = jnp.concatenate([d2, d1], axis=1)
    d2 = conv_transpose2d(d2, p["u1a"]["w"], p["u1a"]["b"])
    d2 = conv_in(p["u1b"], d2, 1, 1)
    d2 = jnp.concatenate([d2, x], axis=1)
    d2 = conv2d(d2, p["oa"]["w"], p["oa"]["b"], stride=1, padding=1)
    d2 = conv_in(p["ob"], d2, 1, 1)
    d2 = pfrb_forward(p["ly1"], d2)
    return d2


# ----------------------------------------------------------------------------
# R and Rt_sig
# ----------------------------------------------------------------------------
def init_r(pg, in_ch, ou_ch):
    return dict(c1=pg.conv(in_ch // 3, in_ch, 3), c2=pg.conv(ou_ch, in_ch // 3, 3))


def r_forward(p, x):
    # TODO(synk): NLBlock_new source not provided; treated as identity.
    x = conv2d(x, p["c1"]["w"], p["c1"]["b"], stride=1, padding=1)
    x = conv2d(x, p["c2"]["w"], p["c2"]["b"], stride=1, padding=1, norm=True)
    return x


def init_rt_sig(pg, in_ch, ou_ch, num_block=4, spatial=256):
    # TODO(synk): reference hard-codes pfrb_sig_block(num_fre=256 // 4); we use
    # spatial // num_block so the same structure runs at small spatial sizes.
    return dict(
        num_block=num_block,
        ly0=init_pfrb(pg, num_fre=spatial // num_block),
        ly1=init_pfrb(pg, num_fre=spatial // num_block),
        out_c1=pg.conv(in_ch * 4, in_ch, 3),
        out_c2=pg.conv(ou_ch, in_ch * 4, 3),
    )


def rt_sig_forward(p, x, H_true):
    nblk = p["num_block"]
    # TODO(synk): NLBlock_new source not provided; treated as identity.
    x = space_to_depth(x, nblk)
    if H_true:
        x = jnp.transpose(x, (0, 2, 1, 3))
        x = pfrb_forward(p["ly0"], x)
        x = pfrb_forward(p["ly1"], x)
        x = jnp.transpose(x, (0, 2, 1, 3))
        x = depth_to_space(x, 4)
    else:
        x = jnp.transpose(x, (0, 3, 1, 2))
        x = pfrb_forward(p["ly0"], x)
        x = pfrb_forward(p["ly1"], x)
        x = jnp.transpose(x, (0, 2, 3, 1))
        x = depth_to_space(x, nblk)
    x = conv_in(p["out_c1"], x, 1, 1)
    x = conv_in(p["out_c2"], x, 1, 1)
    return x


# ----------------------------------------------------------------------------
# OUSC
# ----------------------------------------------------------------------------
def init_ousc(pg, num_spectral, num_slc, spatial=256):
    return dict(
        start_Rt=init_rt_sig(pg, num_slc, num_spectral, spatial=spatial),
        Rt=init_rt_sig(pg, num_slc, num_spectral, spatial=spatial),
        R=init_r(pg, num_spectral, num_slc),
        C_CT=init_cct(pg),
        pro=init_prox(pg, num_spectral, num_spectral),
        pro_bre=init_prox(pg, num_spectral, num_spectral),
    )


def ousc_forward(p, lr_hsi, hr_msi):
    out = rt_sig_forward(p["start_Rt"], hr_msi, True)
    e_hsi1 = r_forward(p["R"], out) - hr_msi
    pro_left = rt_sig_forward(p["Rt"], e_hsi1, True)
    pro_right = rt_sig_forward(p["Rt"], e_hsi1, False)
    pro_fre, e_msi1 = cct_forward(p["C_CT"], out, lr_hsi)
    pro_left_out = prox_forward(p["pro_bre"], pro_left + out)
    pro_right_out = prox_forward(p["pro_bre"], pro_right + out)
    pro_fre = prox_forward(p["pro_bre"], pro_fre + out)
    out1 = prox_forward(p["pro"], pro_fre + pro_left + pro_right)
    return out1, e_hsi1, e_msi1, pro_left_out, pro_right_out, pro_fre


# ----------------------------------------------------------------------------
if __name__ == "__main__":
    # num_spectral=31 and the 4x lr/hr spatial ratio are forced by the C_CT /
    # Prox defaults; the Rt_sig pfrb num_fre is parameterized (= H // 4) so a
    # small 32x32 spatial size runs the identical structure quickly.
    B, num_slc, num_spectral, H, W = 1, 3, 31, 32, 32

    key = jax.random.PRNGKey(0)
    k1, k2 = jax.random.split(key)
    hr_msi = jax.random.normal(k1, (B, num_slc, H, W), jnp.float32)
    lr_hsi = jax.random.normal(k2, (B, num_spectral, H // 4, W // 4), jnp.float32)

    params = init_ousc(ParamGen(jax.random.PRNGKey(42)), num_spectral, num_slc, spatial=H)

    outs = ousc_forward(params, lr_hsi, hr_msi)
    jax.block_until_ready(outs)
    print("KERNEL_OK")
</pallas_src>

<mosaic_0001>
module attributes {stable_mosaic.version = 11 : i64} {
  func.func @_bmm_kernel(%arg0: i32, %arg1: i32, %arg2: memref<1x4x9xbf16, #tpu.memory_space<vmem>>, %arg3: memref<4x9x384xbf16, #tpu.memory_space<vmem>>, %arg4: memref<1x4x1xf32, #tpu.memory_space<vmem>>, %arg5: memref<4x4x384xf32, #tpu.memory_space<vmem>>) attributes {dimension_semantics = [#tpu.dimension_semantics<parallel>, #tpu.dimension_semantics<parallel>], iteration_bounds = array<i64: 2, 1>, scalar_prefetch = 0 : i64, scratch_operands = 0 : i64, tpu.core_type = #tpu.core_type<tc>, window_params = [{pipeline_mode = #tpu.pipeline_mode<synchronous>, transform_indices = @transform_0, window_bounds = array<i64: 1, 4, 9>}, {transform_indices = @transform_1, window_bounds = array<i64: 4, 9, 384>}, {pipeline_mode = #tpu.pipeline_mode<synchronous>, transform_indices = @transform_2, window_bounds = array<i64: 1, 4, 1>}, {transform_indices = @transform_3, window_bounds = array<i64: 4, 4, 384>}]} {
    %c0 = arith.constant 0 : index
    %c0_0 = arith.constant 0 : index
    %c0_1 = arith.constant 0 : index
    %0 = vector.load %arg2[%c0, %c0_0, %c0_1] : memref<1x4x9xbf16, #tpu.memory_space<vmem>>, vector<1x4x9xbf16>
    %1 = vector.shape_cast %0 : vector<1x4x9xbf16> to vector<4x9xbf16>
    %c0_2 = arith.constant 0 : index
    %c0_3 = arith.constant 0 : index
    %c0_4 = arith.constant 0 : index
    %2 = vector.load %arg4[%c0_2, %c0_3, %c0_4] : memref<1x4x1xf32, #tpu.memory_space<vmem>>, vector<1x4x1xf32>
    %3 = vector.shape_cast %2 : vector<1x4x1xf32> to vector<4x1xf32>
    %c0_5 = arith.constant 0 : index
    %c0_6 = arith.constant 0 : index
    %c0_7 = arith.constant 0 : index
    %4 = vector.load %arg3[%c0_5, %c0_6, %c0_7] : memref<4x9x384xbf16, #tpu.memory_space<vmem>>, vector<1x9x384xbf16>
    %5 = vector.shape_cast %4 : vector<1x9x384xbf16> to vector<9x384xbf16>
    %cst = arith.constant dense<0.000000e+00> : vector<4x384xf32>
    %6 = tpu.matmul %1, %5, %cst {dimension_numbers = #tpu.dot_dimension_numbers<[1], [0], [0], [1], [0, 0, 1, 1], [], []>} : vector<4x9xbf16>, vector<9x384xbf16>, vector<4x384xf32> -> vector<4x384xf32>
    %7 = vector.broadcast %3 : vector<4x1xf32> to vector<4x384xf32>
    %8 = arith.addf %6, %7 : vector<4x384xf32>
    %cst_8 = arith.constant dense<0.000000e+00> : vector<4xf32>
    %9 = vector.multi_reduction <add>, %8, %cst_8 [1] : vector<4x384xf32> to vector<4xf32>
    %10 = vector.shape_cast %9 : vector<4xf32> to vector<4x1xf32>
    %cst_9 = arith.constant 3.840000e+02 : f32
    %11 = vector.broadcast %cst_9 : f32 to vector<4x1xf32>
    %12 = arith.divf %10, %11 : vector<4x1xf32>
    %13 = arith.mulf %8, %8 : vector<4x384xf32>
    %cst_10 = arith.constant dense<0.000000e+00> : vector<4xf32>
    %14 = vector.multi_reduction <add>, %13, %cst_10 [1] : vector<4x384xf32> to vector<4xf32>
    %15 = vector.shape_cast %14 : vector<4xf32> to vector<4x1xf32>
    %cst_11 = arith.constant 3.840000e+02 : f32
    %16 = vector.broadcast %cst_11 : f32 to vector<4x1xf32>
    %17 = arith.divf %15, %16 : vector<4x1xf32>
    %18 = arith.mulf %12, %12 : vector<4x1xf32>
    %19 = arith.subf %17, %18 : vector<4x1xf32>
    %cst_12 = arith.constant 0.000000e+00 : f32
    %20 = vector.broadcast %cst_12 : f32 to vector<4x1xf32>
    %21 = arith.maximumf %19, %20 : vector<4x1xf32>
    %22 = vector.broadcast %12 : vector<4x1xf32> to vector<4x384xf32>
    %23 = arith.subf %8, %22 : vector<4x384xf32>
    %cst_13 = arith.constant 9.99999974E-6 : f32
    %24 = vector.broadcast %cst_13 : f32 to vector<4x1xf32>
    %25 = arith.addf %21, %24 : vector<4x1xf32>
    %26 = math.rsqrt %25 : vector<4x1xf32>
    %27 = vector.broadcast %26 : vector<4x1xf32> to vector<4x384xf32>
    %28 = arith.mulf %23, %27 : vector<4x384xf32>
    %c0_14 = arith.constant 0 : index
    %c0_15 = arith.constant 0 : index
    %c0_16 = arith.constant 0 : index
    %29 = vector.load %arg5[%c0_14, %c0_15, %c0_16] : memref<4x4x384xf32, #tpu.memory_space<vmem>>, vector<1x4x384xf32>
    %30 = vector.shape_cast %29 : vector<1x4x384xf32> to vector<4x384xf32>
    %31 = vector.shape_cast %28 : vector<4x384xf32> to vector<1x4x384xf32>
    tpu.vector_store %arg5[%c0_14, %c0_15, %c0_16], %31 {strides = array<i32>} : memref<4x4x384xf32, #tpu.memory_space<vmem>>, vector<1x4x384xf32>,
    %c1 = arith.constant 1 : index
    %c0_17 = arith.constant 0 : index
    %c0_18 = arith.constant 0 : index
    %32 = vector.load %arg3[%c1, %c0_17, %c0_18] : memref<4x9x384xbf16, #tpu.memory_space<vmem>>, vector<1x9x384xbf16>
    %33 = vector.shape_cast %32 : vector<1x9x384xbf16> to vector<9x384xbf16>
    %cst_19 = arith.constant dense<0.000000e+00> : vector<4x384xf32>
    %34 = tpu.matmul %1, %33, %cst_19 {dimension_numbers = #tpu.dot_dimension_numbers<[1], [0], [0], [1], [0, 0, 1, 1], [], []>} : vector<4x9xbf16>, vector<9x384xbf16>, vector<4x384xf32> -> vector<4x384xf32>
    %35 = vector.broadcast %3 : vector<4x1xf32> to vector<4x384xf32>
    %36 = arith.addf %34, %35 : vector<4x384xf32>
    %cst_20 = arith.constant dense<0.000000e+00> : vector<4xf32>
    %37 = vector.multi_reduction <add>, %36, %cst_20 [1] : vector<4x384xf32> to vector<4xf32>
    %38 = vector.shape_cast %37 : vector<4xf32> to vector<4x1xf32>
    %cst_21 = arith.constant 3.840000e+02 : f32
    %39 = vector.broadcast %cst_21 : f32 to vector<4x1xf32>
    %40 = arith.divf %38, %39 : vector<4x1xf32>
    %41 = arith.mulf %36, %36 : vector<4x384xf32>
    %cst_22 = arith.constant dense<0.000000e+00> : vector<4xf32>
    %42 = vector.multi_reduction <add>, %41, %cst_22 [1] : vector<4x384xf32> to vector<4xf32>
    %43 = vector.shape_cast %42 : vector<4xf32> to vector<4x1xf32>
    %cst_23 = arith.constant 3.840000e+02 : f32
    %44 = vector.broadcast %cst_23 : f32 to vector<4x1xf32>
    %45 = arith.divf %43, %44 : vector<4x1xf32>
    %46 = arith.mulf %40, %40 : vector<4x1xf32>
    %47 = arith.subf %45, %46 : vector<4x1xf32>
    %cst_24 = arith.constant 0.000000e+00 : f32
    %48 = vector.broadcast %cst_24 : f32 to vector<4x1xf32>
    %49 = arith.maximumf %47, %48 : vector<4x1xf32>
    %50 = vector.broadcast %40 : vector<4x1xf32> to vector<4x384xf32>
    %51 = arith.subf %36, %50 : vector<4x384xf32>
    %cst_25 = arith.constant 9.99999974E-6 : f32
    %52 = vector.broadcast %cst_25 : f32 to vector<4x1xf32>
    %53 = arith.addf %49, %52 : vector<4x1xf32>
    %54 = math.rsqrt %53 : vector<4x1xf32>
    %55 = vector.broadcast %54 : vector<4x1xf32> to vector<4x384xf32>
    %56 = arith.mulf %51, %55 : vector<4x384xf32>
    %c1_26 = arith.constant 1 : index
    %c0_27 = arith.constant 0 : index
    %c0_28 = arith.constant 0 : index
    %57 = vector.load %arg5[%c1_26, %c0_27, %c0_28] : memref<4x4x384xf32, #tpu.memory_space<vmem>>, vector<1x4x384xf32>
    %58 = vector.shape_cast %57 : vector<1x4x384xf32> to vector<4x384xf32>
    %59 = vector.shape_cast %56 : vector<4x384xf32> to vector<1x4x384xf32>
    tpu.vector_store %arg5[%c1_26, %c0_27, %c0_28], %59 {strides = array<i32>} : memref<4x4x384xf32, #tpu.memory_space<vmem>>, vector<1x4x384xf32>,
    %c2 = arith.constant 2 : index
    %c0_29 = arith.constant 0 : index
    %c0_30 = arith.constant 0 : index
    %60 = vector.load %arg3[%c2, %c0_29, %c0_30] : memref<4x9x384xbf16, #tpu.memory_space<vmem>>, vector<1x9x384xbf16>
    %61 = vector.shape_cast %60 : vector<1x9x384xbf16> to vector<9x384xbf16>
    %cst_31 = arith.constant dense<0.000000e+00> : vector<4x384xf32>
    %62 = tpu.matmul %1, %61, %cst_31 {dimension_numbers = #tpu.dot_dimension_numbers<[1], [0], [0], [1], [0, 0, 1, 1], [], []>} : vector<4x9xbf16>, vector<9x384xbf16>, vector<4x384xf32> -> vector<4x384xf32>
    %63 = vector.broadcast %3 : vector<4x1xf32> to vector<4x384xf32>
    %64 = arith.addf %62, %63 : vector<4x384xf32>
    %cst_32 = arith.constant dense<0.000000e+00> : vector<4xf32>
    %65 = vector.multi_reduction <add>, %64, %cst_32 [1] : vector<4x384xf32> to vector<4xf32>
    %66 = vector.shape_cast %65 : vector<4xf32> to vector<4x1xf32>
    %cst_33 = arith.constant 3.840000e+02 : f32
    %67 = vector.broadcast %cst_33 : f32 to vector<4x1xf32>
    %68 = arith.divf %66, %67 : vector<4x1xf32>
    %69 = arith.mulf %64, %64 : vector<4x384xf32>
    %cst_34 = arith.constant dense<0.000000e+00> : vector<4xf32>
    %70 = vector.multi_reduction <add>, %69, %cst_34 [1] : vector<4x384xf32> to vector<4xf32>
    %71 = vector.shape_cast %70 : vector<4xf32> to vector<4x1xf32>
    %cst_35 = arith.constant 3.840000e+02 : f32
    %72 = vector.broadcast %cst_35 : f32 to vector<4x1xf32>
    %73 = arith.divf %71, %72 : vector<4x1xf32>
    %74 = arith.mulf %68, %68 : vector<4x1xf32>
    %75 = arith.subf %73, %74 : vector<4x1xf32>
    %cst_36 = arith.constant 0.000000e+00 : f32
    %76 = vector.broadcast %cst_36 : f32 to vector<4x1xf32>
    %77 = arith.maximumf %75, %76 : vector<4x1xf32>
    %78 = vector.broadcast %68 : vector<4x1xf32> to vector<4x384xf32>
    %79 = arith.subf %64, %78 : vector<4x384xf32>
    %cst_37 = arith.constant 9.99999974E-6 : f32
    %80 = vector.broadcast %cst_37 : f32 to vector<4x1xf32>
    %81 = arith.addf %77, %80 : vector<4x1xf32>
    %82 = math.rsqrt %81 : vector<4x1xf32>
    %83 = vector.broadcast %82 : vector<4x1xf32> to vector<4x384xf32>
    %84 = arith.mulf %79, %83 : vector<4x384xf32>
    %c2_38 = arith.constant 2 : index
    %c0_39 = arith.constant 0 : index
    %c0_40 = arith.constant 0 : index
    %85 = vector.load %arg5[%c2_38, %c0_39, %c0_40] : memref<4x4x384xf32, #tpu.memory_space<vmem>>, vector<1x4x384xf32>
    %86 = vector.shape_cast %85 : vector<1x4x384xf32> to vector<4x384xf32>
    %87 = vector.shape_cast %84 : vector<4x384xf32> to vector<1x4x384xf32>
    tpu.vector_store %arg5[%c2_38, %c0_39, %c0_40], %87 {strides = array<i32>} : memref<4x4x384xf32, #tpu.memory_space<vmem>>, vector<1x4x384xf32>,
    %c3 = arith.constant 3 : index
    %c0_41 = arith.constant 0 : index
    %c0_42 = arith.constant 0 : index
    %88 = vector.load %arg3[%c3, %c0_41, %c0_42] : memref<4x9x384xbf16, #tpu.memory_space<vmem>>, vector<1x9x384xbf16>
    %89 = vector.shape_cast %88 : vector<1x9x384xbf16> to vector<9x384xbf16>
    %cst_43 = arith.constant dense<0.000000e+00> : vector<4x384xf32>
    %90 = tpu.matmul %1, %89, %cst_43 {dimension_numbers = #tpu.dot_dimension_numbers<[1], [0], [0], [1], [0, 0, 1, 1], [], []>} : vector<4x9xbf16>, vector<9x384xbf16>, vector<4x384xf32> -> vector<4x384xf32>
    %91 = vector.broadcast %3 : vector<4x1xf32> to vector<4x384xf32>
    %92 = arith.addf %90, %91 : vector<4x384xf32>
    %cst_44 = arith.constant dense<0.000000e+00> : vector<4xf32>
    %93 = vector.multi_reduction <add>, %92, %cst_44 [1] : vector<4x384xf32> to vector<4xf32>
    %94 = vector.shape_cast %93 : vector<4xf32> to vector<4x1xf32>
    %cst_45 = arith.constant 3.840000e+02 : f32
    %95 = vector.broadcast %cst_45 : f32 to vector<4x1xf32>
    %96 = arith.divf %94, %95 : vector<4x1xf32>
    %97 = arith.mulf %92, %92 : vector<4x384xf32>
    %cst_46 = arith.constant dense<0.000000e+00> : vector<4xf32>
    %98 = vector.multi_reduction <add>, %97, %cst_46 [1] : vector<4x384xf32> to vector<4xf32>
    %99 = vector.shape_cast %98 : vector<4xf32> to vector<4x1xf32>
    %cst_47 = arith.constant 3.840000e+02 : f32
    %100 = vector.broadcast %cst_47 : f32 to vector<4x1xf32>
    %101 = arith.divf %99, %100 : vector<4x1xf32>
    %102 = arith.mulf %96, %96 : vector<4x1xf32>
    %103 = arith.subf %101, %102 : vector<4x1xf32>
    %cst_48 = arith.constant 0.000000e+00 : f32
    %104 = vector.broadcast %cst_48 : f32 to vector<4x1xf32>
    %105 = arith.maximumf %103, %104 : vector<4x1xf32>
    %106 = vector.broadcast %96 : vector<4x1xf32> to vector<4x384xf32>
    %107 = arith.subf %92, %106 : vector<4x384xf32>
    %cst_49 = arith.constant 9.99999974E-6 : f32
    %108 = vector.broadcast %cst_49 : f32 to vector<4x1xf32>
    %109 = arith.addf %105, %108 : vector<4x1xf32>
    %110 = math.rsqrt %109 : vector<4x1xf32>
    %111 = vector.broadcast %110 : vector<4x1xf32> to vector<4x384xf32>
    %112 = arith.mulf %107, %111 : vector<4x384xf32>
    %c3_50 = arith.constant 3 : index
    %c0_51 = arith.constant 0 : index
    %c0_52 = arith.constant 0 : index
    %113 = vector.load %arg5[%c3_50, %c0_51, %c0_52] : memref<4x4x384xf32, #tpu.memory_space<vmem>>, vector<1x4x384xf32>
    %114 = vector.shape_cast %113 : vector<1x4x384xf32> to vector<4x384xf32>
    %115 = vector.shape_cast %112 : vector<4x384xf32> to vector<1x4x384xf32>
    tpu.vector_store %arg5[%c3_50, %c0_51, %c0_52], %115 {strides = array<i32>} : memref<4x4x384xf32, #tpu.memory_space<vmem>>, vector<1x4x384xf32>,
    return
  }
  func.func @transform_0(%arg0: i32, %arg1: i32) -> (i32, i32, i32) {
    %c0_i32 = arith.constant 0 : i32
    %c0_i32_0 = arith.constant 0 : i32
    %c0_i32_1 = arith.constant 0 : i32
    %c0_i32_2 = arith.constant 0 : i32
    return %c0_i32, %c0_i32_0, %c0_i32_1 : i32, i32, i32
  }
  func.func @transform_1(%arg0: i32, %arg1: i32) -> (i32, i32, i32) {
    %c0_i32 = arith.constant 0 : i32
    %c0_i32_0 = arith.constant 0 : i32
    return %arg0, %c0_i32, %arg1 : i32, i32, i32
  }
  func.func @transform_2(%arg0: i32, %arg1: i32) -> (i32, i32, i32) {
    %c0_i32 = arith.constant 0 : i32
    %c0_i32_0 = arith.constant 0 : i32
    %c0_i32_1 = arith.constant 0 : i32
    %c0_i32_2 = arith.constant 0 : i32
    return %c0_i32, %c0_i32_0, %c0_i32_1 : i32, i32, i32
  }
  func.func @transform_3(%arg0: i32, %arg1: i32) -> (i32, i32, i32) {
    %c0_i32 = arith.constant 0 : i32
    %c0_i32_0 = arith.constant 0 : i32
    return %arg0, %c0_i32, %arg1 : i32, i32, i32
  }
}

</mosaic_0001>

<llo_original>
// kernel: batched_matmul_bias.1
$region0: #{batched_matmul_bias.1}
  #allocation0 [shape = 'u32[]', space=smem, size = 0x4, offset = 0x4, fixed_abs, tag = 'smem constant byte address 0x4 - core index']
  #allocation1 [shape = 'u32[144,128]{1,0:T(1,128)}', space=vmem, size = 0x12000, scoped, tag = 'internal scratch']
  %s0 = inlined_call_operand.vmem [shape: bf16[1,4,9], index: 0, kind: input, shape index: {}]
  %s1 = inlined_call_operand.vmem [shape: bf16[8,9,384], index: 1, kind: input, shape index: {}]
  %s2 = inlined_call_operand.vmem [shape: f32[1,4,1], index: 2, kind: input, shape index: {}]
  %s3 = inlined_call_operand.hbm [shape: f32[8,4,384], index: 3, kind: output, shape index: {}]
  %s4 = sld [smem:[#allocation0]]
  $region45: #{batched_matmul_bias.1} parent=0
    _
  %s6 = ssub.s32 1, %s4
  %s7 = scalar_select 0, %s6, %s4
  $region1: #{batched_matmul_bias.1} parent=0
    #allocation2 [shape = 'u8[49152]{0}', space=vmem, size = 0xc000, scoped, tag = 'output window, operand 0']
    #allocation3 [shape = 's32[2]{0}', space=sflag, size = 0x8, scoped, tag = 'scoped memory for batched_matmul_bias.1']
    %8 = vsyncpa [#allocation3], 0
    %s9 = scalar_lea.sflag [#allocation3], 1
    %10 = vsyncpa %s9, 0
    loop: start=0, step=1, limit=4
    $region2: #{batched_matmul_bias.1} parent=1 // loop_pre_header
      _
    $region3: #{batched_matmul_bias.1} parent=1 // loop_header
      %s12 = sphi 0, %s16
      %p13 = scmp.ge.s32.totalorder %s12, 4
      %s19 = sphi 0, %s31
      %s20 = sphi 0, %s27
      %s21 = sphi 0, %s19
      %s22 = sphi 0, %s20
      %s23 = sphi 0, %s21
      %s24 = sphi 0, %s22
      %s32 = sphi 0, %s32
      %s34 = sphi 0, %s32
      %s35 = sphi 0, %s34
      %s49 = sphi 0, %s35
      %s57 = sphi 0, %s59
      %s60 = sphi 0, %s57
      %s61 = sphi 0, %s60
      %s77 = sphi 0, %s61
      %s81 = sphi 0, %s81
      %s83 = sphi 0, %s81
      %s84 = sphi 0, %s83
      %s98 = sphi 0, %s84
      %s106 = sphi 0, %s108
      %s109 = sphi 0, %s106
      %s110 = sphi 0, %s109
      %s126 = sphi 0, %s110
    $region4: #{batched_matmul_bias.1} parent=1 // loop_header_branch
      %15 = sbr.rel (%p13) target = $region8
    $region5: #{batched_matmul_bias.1} parent=1 // loop_body
      %s17 = ssub.s32 %s12, 1
      %s18 = ssub.s32 %s12, 2
      %s25 = sadd.s32 1, %s20
      %p26 = scmp.ge.s32.totalorder %s25, 1
      %s27 = scalar_select %p26, 0, %s25
      %s28 = sadd.s32 1, %s19
      %s29 = scalar_select %p26, %s28, %s19
      %p30 = scmp.ge.s32.totalorder %s29, 2
      %s31 = scalar_select %p30, 0, %s29
      %s33 = sadd.s32 %s32, 1
      %p36 = scmp.eq.s32.totalorder %s12, 1
      %p37 = scmp.ne.s32.totalorder %s32, %s34
      %p38 = scmp.eq.s32.totalorder %s12, 0
      %p39 = por %p37, %p38
      %p40 = scmp.ne.s32.totalorder %s32, %s34
      %p41 = scmp.eq.s32.totalorder %s17, 1
      %p42 = por %p40, %p41
      %p43 = scmp.ne.s32.totalorder %s34, %s35
      %p44 = scmp.eq.s32.totalorder %s17, 0
      %p45 = por %p43, %p44
      %p46 = scmp.ne.s32.totalorder %s34, %s35
      %p47 = scmp.eq.s32.totalorder %s18, 1
      %p48 = por %p46, %p47
      %p50 = scmp.ne.s32.totalorder %s35, %s49
      %p51 = scmp.eq.s32.totalorder %s18, 0
      %p52 = por %p50, %p51
      %s53 = ssub.s32 %s19, %s31
      %s54 = ssub.s32 %s20, %s27
      %s55 = sor.u32 %s53, %s54
      %p56 = scmp.eq.s32.totalorder %s55, 0
      %s58 = sadd.s32 %s57, 1
      %s59 = scalar_select %p56, %s57, %s58
      %p62 = pneg %p56
      %p63 = scmp.eq.s32.totalorder %s12, 1
      %p64 = por %p62, %p63
      %p65 = scmp.ne.s32.totalorder %s57, %s60
      %p66 = scmp.eq.s32.totalorder %s12, 0
      %p67 = por %p65, %p66
      %p68 = scmp.ne.s32.totalorder %s57, %s60
      %p69 = scmp.eq.s32.totalorder %s17, 1
      %p70 = por %p68, %p69
      %p71 = scmp.ne.s32.totalorder %s60, %s61
      %p72 = scmp.eq.s32.totalorder %s17, 0
      %p73 = por %p71, %p72
      %p74 = scmp.ne.s32.totalorder %s60, %s61
      %p75 = scmp.eq.s32.totalorder %s18, 1
      %p76 = por %p74, %p75
      %p78 = scmp.ne.s32.totalorder %s61, %s77
      %p79 = scmp.eq.s32.totalorder %s18, 0
      %p80 = por %p78, %p79
      %s82 = sadd.s32 %s81, 1
      %p85 = scmp.eq.s32.totalorder %s12, 1
      %p86 = scmp.ne.s32.totalorder %s81, %s83
      %p87 = scmp.eq.s32.totalorder %s12, 0
      %p88 = por %p86, %p87
      %p89 = scmp.ne.s32.totalorder %s81, %s83
      %p90 = scmp.eq.s32.totalorder %s17, 1
      %p91 = por %p89, %p90
      %p92 = scmp.ne.s32.totalorder %s83, %s84
      %p93 = scmp.eq.s32.totalorder %s17, 0
      %p94 = por %p92, %p93
      %p95 = scmp.ne.s32.totalorder %s83, %s84
      %p96 = scmp.eq.s32.totalorder %s18, 1
      %p97 = por %p95, %p96
      %p99 = scmp.ne.s32.totalorder %s84, %s98
      %p100 = scmp.eq.s32.totalorder %s18, 0
      %p101 = por %p99, %p100
      %s102 = ssub.s32 %s19, %s31
      %s103 = ssub.s32 %s20, %s27
      %s104 = sor.u32 %s102, %s103
      %p105 = scmp.eq.s32.totalorder %s104, 0
      %s107 = sadd.s32 %s106, 1
      %s108 = scalar_select %p105, %s106, %s107
      %p111 = pneg %p105
      %p112 = scmp.eq.s32.totalorder %s12, 1
      %p113 = por %p111, %p112
      %p114 = scmp.ne.s32.totalorder %s106, %s109
      %p115 = scmp.eq.s32.totalorder %s12, 0
      %p116 = por %p114, %p115
      %p117 = scmp.ne.s32.totalorder %s106, %s109
      %p118 = scmp.eq.s32.totalorder %s17, 1
      %p119 = por %p117, %p118
      %p120 = scmp.ne.s32.totalorder %s109, %s110
      %p121 = scmp.eq.s32.totalorder %s17, 0
      %p122 = por %p120, %p121
      %p123 = scmp.ne.s32.totalorder %s109, %s110
      %p124 = scmp.eq.s32.totalorder %s18, 1
      %p125 = por %p123, %p124
      %p127 = scmp.ne.s32.totalorder %s110, %s126
      %p128 = scmp.eq.s32.totalorder %s18, 0
      %p129 = por %p127, %p128
      %p130 = scmp.le.s32.totalorder 1, %s12
      %p131 = scmp.lt.s32.totalorder %s12, 3
      %p132 = pnand %p130, %p131
      %p133 = pneg %p132
      // Predicated region
      $region9: #{batched_matmul_bias.1} parent=5 // pred_check
        _
      $region10: #{batched_matmul_bias.1} parent=5 // pred_check_branch
        %135 = sbr.rel (%p132) target = $region12
      $region11: #{batched_matmul_bias.1} parent=5 // pred_region
        %s136 = ssub.s32 %s12, 1
        // Predicated region
        $region13: #{batched_matmul_bias.1} parent=11 // pred_check
          %p137 = pneg %p45
        $region14: #{batched_matmul_bias.1} parent=11 // pred_check_branch
          %139 = sbr.rel (%p137) target = $region16
        $region15: #{batched_matmul_bias.1} parent=11 // pred_region
          _
        $region16: #{batched_matmul_bias.1} parent=11 // pred_fallthru
          _
        // Predicated region
        $region17: #{batched_matmul_bias.1} parent=11 // pred_check
          %p140 = pneg %p94
        $region18: #{batched_matmul_bias.1} parent=11 // pred_check_branch
          %142 = sbr.rel (%p140) target = $region20
        $region19: #{batched_matmul_bias.1} parent=11 // pred_region
          _
        $region20: #{batched_matmul_bias.1} parent=11 // pred_fallthru
          _
      $region12: #{batched_matmul_bias.1} parent=5 // pred_fallthru
        _
      %p143 = scmp.lt.s32.totalorder %s12, 2
      // Predicated region
      $region21: #{batched_matmul_bias.1} parent=5 // pred_check
        %p144 = pneg %p143
      $region22: #{batched_matmul_bias.1} parent=5 // pred_check_branch
        %146 = sbr.rel (%p144) target = $region24
      $region23: #{batched_matmul_bias.1} parent=5 // pred_region
        // Predicated region
        $region25: #{batched_matmul_bias.1} parent=23 // pred_check
          %p147 = pneg %p67
        $region26: #{batched_matmul_bias.1} parent=23 // pred_check_branch
          %149 = sbr.rel (%p147) target = $region28
        $region27: #{batched_matmul_bias.1} parent=23 // pred_region
          %s150 = smul.u32 4, %s19
          %s151 = smul.u32 3, %s20
          %p152 = scmp.lt.s32.totalorder %s150, 7
          %s153 = scalar_select %p152, %s150, 7
          %p154 = scmp.lt.s32.totalorder %s151, 2
          %s155 = scalar_select %p154, %s151, 2
          %s156 = smul.addr %s153, 6
          %s157 = sadd.s32 %s155, %s156
          %s158 = smul.addr %s157, 4
          %s159 = scalar_lea.vmem %s1, %s158
          %s160 = smul.u32 4, %s19
          %s161 = smul.u32 3, %s20
        $region28: #{batched_matmul_bias.1} parent=23 // pred_fallthru
          _
      $region24: #{batched_matmul_bias.1} parent=5 // pred_fallthru
        _
      %p162 = scmp.le.s32.totalorder 1, %s12
      %p163 = scmp.lt.s32.totalorder %s12, 3
      %p164 = pnand %p162, %p163
      %p165 = pneg %p164
      // Predicated region
      $region29: #{batched_matmul_bias.1} parent=5 // pred_check
        _
      $region30: #{batched_matmul_bias.1} parent=5 // pred_check_branch
        %167 = sbr.rel (%p164) target = $region32
      $region31: #{batched_matmul_bias.1} parent=5 // pred_region
        %s168 = ssub.s32 %s12, 1
        %p169 = pneg %p45
        %p170 = pneg %p42
        %s171 = smul.u32 4, %s21
        %s172 = smul.u32 3, %s22
        %p173 = scmp.lt.s32.totalorder %s171, 7
        %s174 = scalar_select %p173, %s171, 7
        %p175 = scmp.lt.s32.totalorder %s172, 2
        %s176 = scalar_select %p175, %s172, 2
        %s177 = smul.addr %s174, 6
        %s178 = sadd.s32 %s176, %s177
        %s179 = smul.addr %s178, 4
        %s180 = scalar_lea.vmem %s1, %s179
        %p181 = pneg %p73
        %p182 = pneg %p70
        %p183 = pneg %p94
        %p184 = pneg %p91
        %p185 = pneg %p122
        %p186 = pneg %p119
        %s187 = sand.u32 %s109, 1
        %s188 = scalar_lea.sflag [#allocation3], %s187
        %s189 = sand.u32 %s109, 1
        %s190 = smul.addr %s189, 48
        %s191 = scalar_lea.vmem [#allocation2], %s190
        %s192 = smul.u32 4, %s21
        %s193 = smul.u32 3, %s22
        %p194 = scmp.lt.s32.totalorder %s192, 7
        %s195 = scalar_select %p194, %s192, 7
        %p196 = scmp.lt.s32.totalorder %s193, 2
        %s197 = scalar_select %p196, %s193, 2
        %s198 = smul.addr %s195, 6
        %s199 = sadd.s32 %s197, %s198
        %s200 = smul.addr %s199, 4
        %s201 = scalar_lea.vmem %s1, %s200
        %s202 = smul.u32 4, %s21
        %s203 = smul.u32 3, %s22
        %s204 = smul.u32 4, %s21
        %s205 = smul.u32 3, %s22
        %v207 = vld [vmem:[%s0] sm:$0x3]
        %v208 = vld [vmem:[%s2] sm:$0xf]
        %v209 = vld [vmem:[%s201] sm:$0xff]
        %v210 = vld [vmem:[%s201 + $0x8] sm:$0xf]
        %v211 = vld [vmem:[%s201 + $0xc] sm:$0x11]
        %v212 = vld [vmem:[%s201 + $0x14] sm:$0x1]
        %214 = vset.pattern.permute.xlu0 0
        %215 = vperm.xlu0 %214, %v208
        %v216 = vpop.permute.xlu0 %215
        %v222 = vunpack.c.l.b16 %v209
        %v223 = vunpack.c.h.b16 %v209
        %v224 = vunpack.c.l.b16 %v210
        %v225 = vunpack.c.l.b16 %v211
        %v226 = vunpack.c.h.b16 %v211
        %v227 = vunpack.c.l.b16 %v212
        %v228 = vpack.c.b16 %v225, %v222
        %v229 = vpack.c.b16 %v226, %v223
        %v230 = vpack.c.b16 %v227, %v224
        %vm231 = vcmask 72704
        %v233 = vsel %vm231, %v207, 0
        %vm235 = vcmask 1043456
        %vm236 = vcmask 1044480
        %v237 = vsel %vm235, 4294967295, 65535
        %v238 = vsel %vm236, %v237, 0
        %v240 = vand.u32 %v228, %v238
        %v243 = vand.u32 %v229, %v238
        %v246 = vand.u32 %v230, %v238
        %248 = vmatprep.subr.bf16.mxu0 %v243
        %249 = vmatpush1.bf16.msra.mxu0 %v240
        %250 = vmatprep.subr.bf16.mxu0 0
        %251 = vmatpush1.bf16.msra.mxu0 0
        %252 = vmatprep.subr.bf16.mxu0 0
        %253 = vmatpush1.bf16.msra.mxu0 0
        %254 = vmatprep.subr.bf16.mxu0 0
        %255 = vmatpush1.bf16.msra.mxu0 0
        %256 = vmatprep.subr.bf16.mxu0 0
        %257 = vmatpush1.bf16.msra.mxu0 0
        %258 = vmatprep.subr.bf16.mxu0 0
        %259 = vmatpush1.bf16.msra.mxu0 0
        %260 = vmatprep.subr.bf16.mxu0 0
        %261 = vmatpush1.bf16.msra.mxu0 0
        %262 = vmatprep.subr.bf16.mxu0 0
        %263 = vmatpush1.bf16.msra.mxu0 0
        %264 = vmatprep.subr.bf16.mxu0 0
        %265 = vmatpush1.bf16.msra.mxu0 0
        %266 = vmatprep.subr.bf16.mxu0 0
        %267 = vmatpush1.bf16.msra.mxu0 0
        %268 = vmatprep.subr.bf16.mxu0 0
        %269 = vmatpush1.bf16.msra.mxu0 0
        %270 = vmatprep.subr.bf16.mxu0 0
        %271 = vmatpush1.bf16.msra.mxu0 0
        %272 = vmatprep.subr.bf16.mxu0 0
        %273 = vmatpush1.bf16.msra.mxu0 0
        %274 = vmatprep.subr.bf16.mxu0 0
        %275 = vmatpush1.bf16.msra.mxu0 0
        %276 = vmatprep.subr.bf16.mxu0 0
        %277 = vmatpush1.bf16.msra.mxu0 0
        %278 = vmatprep.subr.bf16.mxu0 0
        %279 = vmatpush1.bf16.msra.mxu0 0
        %280 = vmatprep.mubr.bf16.mxu0 0
        %281 = vmatmul.mubr.bf16.gmra.mrb[0].mxu0 %v233
        %v282 = vpop.f32.mrb[0].mxu0
        %v283 = vadd.f32 %v216, %v282
        %v284 = vpop.f32.mrb[0].mxu0
        %v285 = vadd.f32 %v216, %v284
        %v286 = vpop.f32.mrb[0].mxu0
        %v287 = vpop.f32.mrb[0].mxu0
        %288 = vdwg.mxu0
        %289 = vmatprep.subr.bf16.mxu0 0
        %290 = vmatpush1.bf16.msra.mxu0 %v246
        %291 = vmatprep.subr.bf16.mxu0 0
        %292 = vmatpush1.bf16.msra.mxu0 0
        %293 = vmatprep.subr.bf16.mxu0 0
        %294 = vmatpush1.bf16.msra.mxu0 0
        %295 = vmatprep.subr.bf16.mxu0 0
        %296 = vmatpush1.bf16.msra.mxu0 0
        %297 = vmatprep.subr.bf16.mxu0 0
        %298 = vmatpush1.bf16.msra.mxu0 0
        %299 = vmatprep.subr.bf16.mxu0 0
        %300 = vmatpush1.bf16.msra.mxu0 0
        %301 = vmatprep.subr.bf16.mxu0 0
        %302 = vmatpush1.bf16.msra.mxu0 0
        %303 = vmatprep.subr.bf16.mxu0 0
        %304 = vmatpush1.bf16.msra.mxu0 0
        %305 = vmatprep.subr.bf16.mxu0 0
        %306 = vmatpush1.bf16.msra.mxu0 0
        %307 = vmatprep.subr.bf16.mxu0 0
        %308 = vmatpush1.bf16.msra.mxu0 0
        %309 = vmatprep.subr.bf16.mxu0 0
        %310 = vmatpush1.bf16.msra.mxu0 0
        %311 = vmatprep.subr.bf16.mxu0 0
        %312 = vmatpush1.bf16.msra.mxu0 0
        %313 = vmatprep.subr.bf16.mxu0 0
        %314 = vmatpush1.bf16.msra.mxu0 0
        %315 = vmatprep.subr.bf16.mxu0 0
        %316 = vmatpush1.bf16.msra.mxu0 0
        %317 = vmatprep.subr.bf16.mxu0 0
        %318 = vmatpush1.bf16.msra.mxu0 0
        %319 = vmatprep.subr.bf16.mxu0 0
        %320 = vmatpush1.bf16.msra.mxu0 0
        %321 = vmatprep.mubr.bf16.mxu0 0
        %322 = vmatmul.mubr.bf16.gmra.mrb[0].mxu0 %v233
        %v323 = vpop.f32.mrb[0].mxu0
        %v324 = vadd.f32 %v216, %v323
        %v325 = vpop.f32.mrb[0].mxu0
        %v326 = vpop.f32.mrb[0].mxu0
        %v327 = vpop.f32.mrb[0].mxu0
        %328 = vdwg.mxu0
        %v329 = vsel %vm235, %v283, 0.0
        %v330 = vsel %vm235, %v285, 0.0
        %v331 = vadd.f32 %v329, %v330
        %v332 = vsel %vm235, %v324, 0.0
        %v333 = vadd.f32 %v331, %v332
        %334 = vadd.xlane.f32.xlu0 %v333
        %v335 = vpop.xlane.xlu0 %334
        %v336 = vrcp.pop 384.0
        %v337 = vmul.f32 %v335, %v336
        %v338 = vmul.f32 %v283, %v283
        %v339 = vmul.f32 %v285, %v285
        %v340 = vmul.f32 %v324, %v324
        %v341 = vsel %vm235, %v338, 0.0
        %v342 = vsel %vm235, %v339, 0.0
        %v343 = vadd.f32 %v341, %v342
        %v344 = vsel %vm235, %v340, 0.0
        %v345 = vadd.f32 %v343, %v344
        %346 = vadd.xlane.f32.xlu0 %v345
        %v347 = vpop.xlane.xlu0 %346
        %v348 = vmul.f32 %v347, %v336
        %v349 = vmul.f32 %v337, %v337
        %v350 = vsub.f32 %v348, %v349
        %v351 = vmax.f32 %v350, 0.0
        %v352 = vsub.f32 %v283, %v337
        %v353 = vsub.f32 %v285, %v337
        %v354 = vsub.f32 %v324, %v337
        %v355 = vadd.f32 %v351, 1e-05
        %v356 = vrsqrt.pop %v355
        %v357 = vmul.f32 %v352, %v356
        %v358 = vmul.f32 %v353, %v356
        %v359 = vmul.f32 %v354, %v356
        %v362 = vcombine.low %v357, %v358
        %364 = vst [vmem:[%s191] sm:$0xff] %v362
        %365 = vst [vmem:[%s191 + $0x8] sm:$0xf] %v359
        %s366 = scalar_lea.vmem %s201, 24
        %v367 = vld [vmem:[%s366] sm:$0xff]
        %v368 = vld [vmem:[%s366 + $0x8] sm:$0xf]
        %v369 = vld [vmem:[%s366 + $0xc] sm:$0x11]
        %v370 = vld [vmem:[%s366 + $0x14] sm:$0x1]
        %v375 = vunpack.c.l.b16 %v367
        %v376 = vunpack.c.h.b16 %v367
        %v377 = vunpack.c.l.b16 %v368
        %v378 = vunpack.c.l.b16 %v369
        %v379 = vunpack.c.h.b16 %v369
        %v380 = vunpack.c.l.b16 %v370
        %v381 = vpack.c.b16 %v378, %v375
        %v382 = vpack.c.b16 %v379, %v376
        %v383 = vpack.c.b16 %v380, %v377
        %v385 = vand.u32 %v381, %v238
        %v388 = vand.u32 %v382, %v238
        %v391 = vand.u32 %v383, %v238
        %393 = vmatprep.subr.bf16.mxu0 %v388
        %394 = vmatpush1.bf16.msra.mxu0 %v385
        %395 = vmatprep.subr.bf16.mxu0 0
        %396 = vmatpush1.bf16.msra.mxu0 0
        %397 = vmatprep.subr.bf16.mxu0 0
        %398 = vmatpush1.bf16.msra.mxu0 0
        %399 = vmatprep.subr.bf16.mxu0 0
        %400 = vmatpush1.bf16.msra.mxu0 0
        %401 = vmatprep.subr.bf16.mxu0 0
        %402 = vmatpush1.bf16.msra.mxu0 0
        %403 = vmatprep.subr.bf16.mxu0 0
        %404 = vmatpush1.bf16.msra.mxu0 0
        %405 = vmatprep.subr.bf16.mxu0 0
        %406 = vmatpush1.bf16.msra.mxu0 0
        %407 = vmatprep.subr.bf16.mxu0 0
        %408 = vmatpush1.bf16.msra.mxu0 0
        %409 = vmatprep.subr.bf16.mxu0 0
        %410 = vmatpush1.bf16.msra.mxu0 0
        %411 = vmatprep.subr.bf16.mxu0 0
        %412 = vmatpush1.bf16.msra.mxu0 0
        %413 = vmatprep.subr.bf16.mxu0 0
        %414 = vmatpush1.bf16.msra.mxu0 0
        %415 = vmatprep.subr.bf16.mxu0 0
        %416 = vmatpush1.bf16.msra.mxu0 0
        %417 = vmatprep.subr.bf16.mxu0 0
        %418 = vmatpush1.bf16.msra.mxu0 0
        %419 = vmatprep.subr.bf16.mxu0 0
        %420 = vmatpush1.bf16.msra.mxu0 0
        %421 = vmatprep.subr.bf16.mxu0 0
        %422 = vmatpush1.bf16.msra.mxu0 0
        %423 = vmatprep.subr.bf16.mxu0 0
        %424 = vmatpush1.bf16.msra.mxu0 0
        %425 = vmatprep.mubr.bf16.mxu0 0
        %426 = vmatmul.mubr.bf16.gmra.mrb[0].mxu0 %v233
        %v427 = vpop.f32.mrb[0].mxu0
        %v428 = vadd.f32 %v216, %v427
        %v429 = vpop.f32.mrb[0].mxu0
        %v430 = vadd.f32 %v216, %v429
        %v431 = vpop.f32.mrb[0].mxu0
        %v432 = vpop.f32.mrb[0].mxu0
        %433 = vdwg.mxu0
        %434 = vmatprep.subr.bf16.mxu0 0
        %435 = vmatpush1.bf16.msra.mxu0 %v391
        %436 = vmatprep.subr.bf16.mxu0 0
        %437 = vmatpush1.bf16.msra.mxu0 0
        %438 = vmatprep.subr.bf16.mxu0 0
        %439 = vmatpush1.bf16.msra.mxu0 0
        %440 = vmatprep.subr.bf16.mxu0 0
        %441 = vmatpush1.bf16.msra.mxu0 0
        %442 = vmatprep.subr.bf16.mxu0 0
        %443 = vmatpush1.bf16.msra.mxu0 0
        %444 = vmatprep.subr.bf16.mxu0 0
        %445 = vmatpush1.bf16.msra.mxu0 0
        %446 = vmatprep.subr.bf16.mxu0 0
        %447 = vmatpush1.bf16.msra.mxu0 0
        %448 = vmatprep.subr.bf16.mxu0 0
        %449 = vmatpush1.bf16.msra.mxu0 0
        %450 = vmatprep.subr.bf16.mxu0 0
        %451 = vmatpush1.bf16.msra.mxu0 0
        %452 = vmatprep.subr.bf16.mxu0 0
        %453 = vmatpush1.bf16.msra.mxu0 0
        %454 = vmatprep.subr.bf16.mxu0 0
        %455 = vmatpush1.bf16.msra.mxu0 0
        %456 = vmatprep.subr.bf16.mxu0 0
        %457 = vmatpush1.bf16.msra.mxu0 0
        %458 = vmatprep.subr.bf16.mxu0 0
        %459 = vmatpush1.bf16.msra.mxu0 0
        %460 = vmatprep.subr.bf16.mxu0 0
        %461 = vmatpush1.bf16.msra.mxu0 0
        %462 = vmatprep.subr.bf16.mxu0 0
        %463 = vmatpush1.bf16.msra.mxu0 0
        %464 = vmatprep.subr.bf16.mxu0 0
        %465 = vmatpush1.bf16.msra.mxu0 0
        %466 = vmatprep.mubr.bf16.mxu0 0
        %467 = vmatmul.mubr.bf16.gmra.mrb[0].mxu0 %v233
        %v468 = vpop.f32.mrb[0].mxu0
        %v469 = vadd.f32 %v216, %v468
        %v470 = vpop.f32.mrb[0].mxu0
        %v471 = vpop.f32.mrb[0].mxu0
        %v472 = vpop.f32.mrb[0].mxu0
        %473 = vdwg.mxu0
        %v474 = vsel %vm235, %v428, 0.0
        %v475 = vsel %vm235, %v430, 0.0
        %v476 = vadd.f32 %v474, %v475
        %v477 = vsel %vm235, %v469, 0.0
        %v478 = vadd.f32 %v476, %v477
        %479 = vadd.xlane.f32.xlu0 %v478
        %v480 = vpop.xlane.xlu0 %479
        %v481 = vmul.f32 %v480, %v336
        %v482 = vmul.f32 %v428, %v428
        %v483 = vmul.f32 %v430, %v430
        %v484 = vmul.f32 %v469, %v469
        %v485 = vsel %vm235, %v482, 0.0
        %v486 = vsel %vm235, %v483, 0.0
        %v487 = vadd.f32 %v485, %v486
        %v488 = vsel %vm235, %v484, 0.0
        %v489 = vadd.f32 %v487, %v488
        %490 = vadd.xlane.f32.xlu0 %v489
        %v491 = vpop.xlane.xlu0 %490
        %v492 = vmul.f32 %v491, %v336
        %v493 = vmul.f32 %v481, %v481
        %v494 = vsub.f32 %v492, %v493
        %v495 = vmax.f32 %v494, 0.0
        %v496 = vsub.f32 %v428, %v481
        %v497 = vsub.f32 %v430, %v481
        %v498 = vsub.f32 %v469, %v481
        %v499 = vadd.f32 %v495, 1e-05
        %v500 = vrsqrt.pop %v499
        %v501 = vmul.f32 %v496, %v500
        %v502 = vmul.f32 %v497, %v500
        %v503 = vmul.f32 %v498, %v500
        %v506 = vcombine.low %v501, %v502
        %s508 = scalar_lea.vmem %s191, 12 [#allocation2]
        %509 = vst [vmem:[%s508] sm:$0xff] %v506
        %510 = vst [vmem:[%s508 + $0x8] sm:$0xf] %v503
        %s511 = scalar_lea.vmem %s201, 48
        %v512 = vld [vmem:[%s511] sm:$0xff]
        %v513 = vld [vmem:[%s511 + $0x8] sm:$0xf]
        %v514 = vld [vmem:[%s511 + $0xc] sm:$0x11]
        %v515 = vld [vmem:[%s511 + $0x14] sm:$0x1]
        %v520 = vunpack.c.l.b16 %v512
        %v521 = vunpack.c.h.b16 %v512
        %v522 = vunpack.c.l.b16 %v513
        %v523 = vunpack.c.l.b16 %v514
        %v524 = vunpack.c.h.b16 %v514
        %v525 = vunpack.c.l.b16 %v515
        %v526 = vpack.c.b16 %v523, %v520
        %v527 = vpack.c.b16 %v524, %v521
        %v528 = vpack.c.b16 %v525, %v522
        %v530 = vand.u32 %v526, %v238
        %v533 = vand.u32 %v527, %v238
        %v536 = vand.u32 %v528, %v238
        %538 = vmatprep.subr.bf16.mxu0 %v533
        %539 = vmatpush1.bf16.msra.mxu0 %v530
        %540 = vmatprep.subr.bf16.mxu0 0
        %541 = vmatpush1.bf16.msra.mxu0 0
        %542 = vmatprep.subr.bf16.mxu0 0
        %543 = vmatpush1.bf16.msra.mxu0 0
        %544 = vmatprep.subr.bf16.mxu0 0
        %545 = vmatpush1.bf16.msra.mxu0 0
        %546 = vmatprep.subr.bf16.mxu0 0
        %547 = vmatpush1.bf16.msra.mxu0 0
        %548 = vmatprep.subr.bf16.mxu0 0
        %549 = vmatpush1.bf16.msra.mxu0 0
        %550 = vmatprep.subr.bf16.mxu0 0
        %551 = vmatpush1.bf16.msra.mxu0 0
        %552 = vmatprep.subr.bf16.mxu0 0
        %553 = vmatpush1.bf16.msra.mxu0 0
        %554 = vmatprep.subr.bf16.mxu0 0
        %555 = vmatpush1.bf16.msra.mxu0 0
        %556 = vmatprep.subr.bf16.mxu0 0
        %557 = vmatpush1.bf16.msra.mxu0 0
        %558 = vmatprep.subr.bf16.mxu0 0
        %559 = vmatpush1.bf16.msra.mxu0 0
        %560 = vmatprep.subr.bf16.mxu0 0
        %561 = vmatpush1.bf16.msra.mxu0 0
        %562 = vmatprep.subr.bf16.mxu0 0
        %563 = vmatpush1.bf16.msra.mxu0 0
        %564 = vmatprep.subr.bf16.mxu0 0
        %565 = vmatpush1.bf16.msra.mxu0 0
        %566 = vmatprep.subr.bf16.mxu0 0
        %567 = vmatpush1.bf16.msra.mxu0 0
        %568 = vmatprep.subr.bf16.mxu0 0
        %569 = vmatpush1.bf16.msra.mxu0 0
        %570 = vmatprep.mubr.bf16.mxu0 0
        %571 = vmatmul.mubr.bf16.gmra.mrb[0].mxu0 %v233
        %v572 = vpop.f32.mrb[0].mxu0
        %v573 = vadd.f32 %v216, %v572
        %v574 = vpop.f32.mrb[0].mxu0
        %v575 = vadd.f32 %v216, %v574
        %v576 = vpop.f32.mrb[0].mxu0
        %v577 = vpop.f32.mrb[0].mxu0
        %578 = vdwg.mxu0
        %579 = vmatprep.subr.bf16.mxu0 0
        %580 = vmatpush1.bf16.msra.mxu0 %v536
        %581 = vmatprep.subr.bf16.mxu0 0
        %582 = vmatpush1.bf16.msra.mxu0 0
        %583 = vmatprep.subr.bf16.mxu0 0
        %584 = vmatpush1.bf16.msra.mxu0 0
        %585 = vmatprep.subr.bf16.mxu0 0
        %586 = vmatpush1.bf16.msra.mxu0 0
        %587 = vmatprep.subr.bf16.mxu0 0
        %588 = vmatpush1.bf16.msra.mxu0 0
        %589 = vmatprep.subr.bf16.mxu0 0
        %590 = vmatpush1.bf16.msra.mxu0 0
        %591 = vmatprep.subr.bf16.mxu0 0
        %592 = vmatpush1.bf16.msra.mxu0 0
        %593 = vmatprep.subr.bf16.mxu0 0
        %594 = vmatpush1.bf16.msra.mxu0 0
        %595 = vmatprep.subr.bf16.mxu0 0
        %596 = vmatpush1.bf16.msra.mxu0 0
        %597 = vmatprep.subr.bf16.mxu0 0
        %598 = vmatpush1.bf16.msra.mxu0 0
        %599 = vmatprep.subr.bf16.mxu0 0
        %600 = vmatpush1.bf16.msra.mxu0 0
        %601 = vmatprep.subr.bf16.mxu0 0
        %602 = vmatpush1.bf16.msra.mxu0 0
        %603 = vmatprep.subr.bf16.mxu0 0
        %604 = vmatpush1.bf16.msra.mxu0 0
        %605 = vmatprep.subr.bf16.mxu0 0
        %606 = vmatpush1.bf16.msra.mxu0 0
        %607 = vmatprep.subr.bf16.mxu0 0
        %608 = vmatpush1.bf16.msra.mxu0 0
        %609 = vmatprep.subr.bf16.mxu0 0
        %610 = vmatpush1.bf16.msra.mxu0 0
        %611 = vmatprep.mubr.bf16.mxu0 0
        %612 = vmatmul.mubr.bf16.gmra.mrb[0].mxu0 %v233
        %v613 = vpop.f32.mrb[0].mxu0
        %v614 = vadd.f32 %v216, %v613
        %v615 = vpop.f32.mrb[0].mxu0
        %v616 = vpop.f32.mrb[0].mxu0
        %v617 = vpop.f32.mrb[0].mxu0
        %618 = vdwg.mxu0
        %v619 = vsel %vm235, %v573, 0.0
        %v620 = vsel %vm235, %v575, 0.0
        %v621 = vadd.f32 %v619, %v620
        %v622 = vsel %vm235, %v614, 0.0
        %v623 = vadd.f32 %v621, %v622
        %624 = vadd.xlane.f32.xlu0 %v623
        %v625 = vpop.xlane.xlu0 %624
        %v626 = vmul.f32 %v625, %v336
        %v627 = vmul.f32 %v573, %v573
        %v628 = vmul.f32 %v575, %v575
        %v629 = vmul.f32 %v614, %v614
        %v630 = vsel %vm235, %v627, 0.0
        %v631 = vsel %vm235, %v628, 0.0
        %v632 = vadd.f32 %v630, %v631
        %v633 = vsel %vm235, %v629, 0.0
        %v634 = vadd.f32 %v632, %v633
        %635 = vadd.xlane.f32.xlu0 %v634
        %v636 = vpop.xlane.xlu0 %635
        %v637 = vmul.f32 %v636, %v336
        %v638 = vmul.f32 %v626, %v626
        %v639 = vsub.f32 %v637, %v638
        %v640 = vmax.f32 %v639, 0.0
        %v641 = vsub.f32 %v573, %v626
        %v642 = vsub.f32 %v575, %v626
        %v643 = vsub.f32 %v614, %v626
        %v644 = vadd.f32 %v640, 1e-05
        %v645 = vrsqrt.pop %v644
        %v646 = vmul.f32 %v641, %v645
        %v647 = vmul.f32 %v642, %v645
        %v648 = vmul.f32 %v643, %v645
        %v651 = vcombine.low %v646, %v647
        %s653 = scalar_lea.vmem %s191, 24 [#allocation2]
        %654 = vst [vmem:[%s653] sm:$0xff] %v651
        %655 = vst [vmem:[%s653 + $0x8] sm:$0xf] %v648
        %s656 = scalar_lea.vmem %s201, 72
        %v657 = vld [vmem:[%s656] sm:$0xff]
        %v658 = vld [vmem:[%s656 + $0x8] sm:$0xf]
        %v659 = vld [vmem:[%s656 + $0xc] sm:$0x11]
        %v660 = vld [vmem:[%s656 + $0x14] sm:$0x1]
        %v665 = vunpack.c.l.b16 %v657
        %v666 = vunpack.c.h.b16 %v657
        %v667 = vunpack.c.l.b16 %v658
        %v668 = vunpack.c.l.b16 %v659
        %v669 = vunpack.c.h.b16 %v659
        %v670 = vunpack.c.l.b16 %v660
        %v671 = vpack.c.b16 %v668, %v665
        %v672 = vpack.c.b16 %v669, %v666
        %v673 = vpack.c.b16 %v670, %v667
        %v675 = vand.u32 %v671, %v238
        %v678 = vand.u32 %v672, %v238
        %v681 = vand.u32 %v673, %v238
        %683 = vmatprep.subr.bf16.mxu0 %v678
        %684 = vmatpush1.bf16.msra.mxu0 %v675
        %685 = vmatprep.subr.bf16.mxu0 0
        %686 = vmatpush1.bf16.msra.mxu0 0
        %687 = vmatprep.subr.bf16.mxu0 0
        %688 = vmatpush1.bf16.msra.mxu0 0
        %689 = vmatprep.subr.bf16.mxu0 0
        %690 = vmatpush1.bf16.msra.mxu0 0
        %691 = vmatprep.subr.bf16.mxu0 0
        %692 = vmatpush1.bf16.msra.mxu0 0
        %693 = vmatprep.subr.bf16.mxu0 0
        %694 = vmatpush1.bf16.msra.mxu0 0
        %695 = vmatprep.subr.bf16.mxu0 0
        %696 = vmatpush1.bf16.msra.mxu0 0
        %697 = vmatprep.subr.bf16.mxu0 0
        %698 = vmatpush1.bf16.msra.mxu0 0
        %699 = vmatprep.subr.bf16.mxu0 0
        %700 = vmatpush1.bf16.msra.mxu0 0
        %701 = vmatprep.subr.bf16.mxu0 0
        %702 = vmatpush1.bf16.msra.mxu0 0
        %703 = vmatprep.subr.bf16.mxu0 0
        %704 = vmatpush1.bf16.msra.mxu0 0
        %705 = vmatprep.subr.bf16.mxu0 0
        %706 = vmatpush1.bf16.msra.mxu0 0
        %707 = vmatprep.subr.bf16.mxu0 0
        %708 = vmatpush1.bf16.msra.mxu0 0
        %709 = vmatprep.subr.bf16.mxu0 0
        %710 = vmatpush1.bf16.msra.mxu0 0
        %711 = vmatprep.subr.bf16.mxu0 0
        %712 = vmatpush1.bf16.msra.mxu0 0
        %713 = vmatprep.subr.bf16.mxu0 0
        %714 = vmatpush1.bf16.msra.mxu0 0
        %715 = vmatprep.mubr.bf16.mxu0 0
        %716 = vmatmul.mubr.bf16.gmra.mrb[0].mxu0 %v233
        %v717 = vpop.f32.mrb[0].mxu0
        %v718 = vadd.f32 %v216, %v717
        %v719 = vpop.f32.mrb[0].mxu0
        %v720 = vadd.f32 %v216, %v719
        %v721 = vpop.f32.mrb[0].mxu0
        %v722 = vpop.f32.mrb[0].mxu0
        %723 = vdwg.mxu0
        %724 = vmatprep.subr.bf16.mxu0 0
        %725 = vmatpush1.bf16.msra.mxu0 %v681
        %726 = vmatprep.subr.bf16.mxu0 0
        %727 = vmatpush1.bf16.msra.mxu0 0
        %728 = vmatprep.subr.bf16.mxu0 0
        %729 = vmatpush1.bf16.msra.mxu0 0
        %730 = vmatprep.subr.bf16.mxu0 0
        %731 = vmatpush1.bf16.msra.mxu0 0
        %732 = vmatprep.subr.bf16.mxu0 0
        %733 = vmatpush1.bf16.msra.mxu0 0
        %734 = vmatprep.subr.bf16.mxu0 0
        %735 = vmatpush1.bf16.msra.mxu0 0
        %736 = vmatprep.subr.bf16.mxu0 0
        %737 = vmatpush1.bf16.msra.mxu0 0
        %738 = vmatprep.subr.bf16.mxu0 0
        %739 = vmatpush1.bf16.msra.mxu0 0
        %740 = vmatprep.subr.bf16.mxu0 0
        %741 = vmatpush1.bf16.msra.mxu0 0
        %742 = vmatprep.subr.bf16.mxu0 0
        %743 = vmatpush1.bf16.msra.mxu0 0
        %744 = vmatprep.subr.bf16.mxu0 0
        %745 = vmatpush1.bf16.msra.mxu0 0
        %746 = vmatprep.subr.bf16.mxu0 0
        %747 = vmatpush1.bf16.msra.mxu0 0
        %748 = vmatprep.subr.bf16.mxu0 0
        %749 = vmatpush1.bf16.msra.mxu0 0
        %750 = vmatprep.subr.bf16.mxu0 0
        %751 = vmatpush1.bf16.msra.mxu0 0
        %752 = vmatprep.subr.bf16.mxu0 0
        %753 = vmatpush1.bf16.msra.mxu0 0
        %754 = vmatprep.subr.bf16.mxu0 0
        %755 = vmatpush1.bf16.msra.mxu0 0
        %756 = vmatprep.mubr.bf16.mxu0 0
        %757 = vmatmul.mubr.bf16.gmra.mrb[0].mxu0 %v233
        %v758 = vpop.f32.mrb[0].mxu0
        %v759 = vadd.f32 %v216, %v758
        %v760 = vpop.f32.mrb[0].mxu0
        %v761 = vpop.f32.mrb[0].mxu0
        %v762 = vpop.f32.mrb[0].mxu0
        %763 = vdwg.mxu0
        %v764 = vsel %vm235, %v718, 0.0
        %v765 = vsel %vm235, %v720, 0.0
        %v766 = vadd.f32 %v764, %v765
        %v767 = vsel %vm235, %v759, 0.0
        %v768 = vadd.f32 %v766, %v767
        %769 = vadd.xlane.f32.xlu0 %v768
        %v770 = vpop.xlane.xlu0 %769
        %v771 = vmul.f32 %v770, %v336
        %v772 = vmul.f32 %v718, %v718
        %v773 = vmul.f32 %v720, %v720
        %v774 = vmul.f32 %v759, %v759
        %v775 = vsel %vm235, %v772, 0.0
        %v776 = vsel %vm235, %v773, 0.0
        %v777 = vadd.f32 %v775, %v776
        %v778 = vsel %vm235, %v774, 0.0
        %v779 = vadd.f32 %v777, %v778
        %780 = vadd.xlane.f32.xlu0 %v779
        %v781 = vpop.xlane.xlu0 %780
        %v782 = vmul.f32 %v781, %v336
        %v783 = vmul.f32 %v771, %v771
        %v784 = vsub.f32 %v782, %v783
        %v785 = vmax.f32 %v784, 0.0
        %v786 = vsub.f32 %v718, %v771
        %v787 = vsub.f32 %v720, %v771
        %v788 = vsub.f32 %v759, %v771
        %v789 = vadd.f32 %v785, 1e-05
        %v790 = vrsqrt.pop %v789
        %v791 = vmul.f32 %v786, %v790
        %v792 = vmul.f32 %v787, %v790
        %v793 = vmul.f32 %v788, %v790
        %v796 = vcombine.low %v791, %v792
        %s798 = scalar_lea.vmem %s191, 36 [#allocation2]
        %799 = vst [vmem:[%s798] sm:$0xff] %v796
        %800 = vst [vmem:[%s798 + $0x8] sm:$0xf] %v793
        %s801 = sand.u32 %s109, 1
        %s802 = scalar_lea.sflag [#allocation3], %s801
        %s803 = sand.u32 %s109, 1
        %s804 = smul.addr %s803, 48
        %s805 = scalar_lea.vmem [#allocation2], %s804
        // Predicated region
        $region33: #{batched_matmul_bias.1} parent=31 // pred_check
          %p806 = pneg %p119
        $region34: #{batched_matmul_bias.1} parent=31 // pred_check_branch
          %808 = sbr.rel (%p806) target = $region36
        $region35: #{batched_matmul_bias.1} parent=31 // pred_region
          %s809 = smul.u32 4, %s21
          %s810 = smul.u32 3, %s22
          %s812 = ssub.s32 768, 768
          %813 = vsyncadd %s802, %s812
          %s814 = smul.addr %s809, 3
          %s815 = sadd.s32 %s810, %s814
          %s816 = smul.addr %s815, 64
          %s817 = scalar_lea.hbm %s3, %s816
          %s818 = sshll.u32 %s805, 4
          %s819 = int_to_ptr.vmem [resolvable:$true] %s818
          %824 = dma.vmem_to_hbm [thread:$0]  %s819, 768, %s817, %s802, 192, 192, 12
        $region36: #{batched_matmul_bias.1} parent=31 // pred_fallthru
          _
      $region32: #{batched_matmul_bias.1} parent=5 // pred_fallthru
        _
      %p825 = scmp.le.s32.totalorder 2, %s12
      // Predicated region
      $region37: #{batched_matmul_bias.1} parent=5 // pred_check
        %p826 = pneg %p825
      $region38: #{batched_matmul_bias.1} parent=5 // pred_check_branch
        %828 = sbr.rel (%p826) target = $region40
      $region39: #{batched_matmul_bias.1} parent=5 // pred_region
        %s829 = ssub.s32 %s12, 2
        // Predicated region
        $region41: #{batched_matmul_bias.1} parent=39 // pred_check
          %p830 = pneg %p125
        $region42: #{batched_matmul_bias.1} parent=39 // pred_check_branch
          %832 = sbr.rel (%p830) target = $region44
        $region43: #{batched_matmul_bias.1} parent=39 // pred_region
          %s833 = sand.u32 %s110, 1
          %s834 = scalar_lea.sflag [#allocation3], %s833
          %s835 = sand.u32 %s110, 1
          %s836 = smul.addr %s835, 48
          %s837 = scalar_lea.vmem [#allocation2], %s836
          %838 = dma.done %s834, 768
        $region44: #{batched_matmul_bias.1} parent=39 // pred_fallthru
          _
      $region40: #{batched_matmul_bias.1} parent=5 // pred_fallthru
        _
    $region6: #{batched_matmul_bias.1} parent=1 // loop_footer
      %s16 = sadd.s32 1, %s12
    $region7: #{batched_matmul_bias.1} parent=1 // loop_footer_branch
      %11 = sbr.rel target = $region3
    $region8: #{batched_matmul_bias.1} parent=1 // loop_exit
      _
    %839 = vsyncpa [#allocation3], 1
    %s840 = scalar_lea.sflag [#allocation3], 1
    %841 = vsyncpa %s840, 1

</llo_original>
